<compile_context>
chip_gen: v5e
topology: v5e:2x2
jax: 0.10.0
libtpu: 0.0.40
codegen_flags: <defaults>
</compile_context>

<pallas_src>
import jax
import jax.numpy as jnp
from jax.experimental import pallas as pl
from jax.experimental.pallas import tpu as pltpu


_GOLDEN_U32 = 0x9E3779B1  # per-layer seed salt


def _layer_seed(base_seed, layer):
    return (int(base_seed) + (layer + 1) * _GOLDEN_U32) % (1 << 32)


def _mix_u32(x):
    """murmur3-style 32-bit finalizer (pure jnp; used in-kernel and in the ref)."""
    x = x ^ (x >> jnp.uint32(16))
    x = x * jnp.uint32(0x7FEB352D)
    x = x ^ (x >> jnp.uint32(15))
    x = x * jnp.uint32(0x846CA68B)
    x = x ^ (x >> jnp.uint32(16))
    return x


def _keep_mask(counter_u32, keep_prob):
    """Pre-scaled Bernoulli(keep_prob) mask from a uint32 per-element counter."""
    h = _mix_u32(counter_u32)
    bits24 = (h >> jnp.uint32(8)).astype(jnp.int32)  # uniform in [0, 2^24)
    thresh = jnp.int32(min(int(round(keep_prob * (1 << 24))), 1 << 24))
    scale = jnp.float32(1.0 / keep_prob)
    return jnp.where(bits24 < thresh, scale, jnp.float32(0.0))


def _make_mlp_kernel(num_hidden, k, tile_n, keep_prob, base_seed):
    """Fused feature-major MLP kernel.

    Ref order: x_ref, [w_l, b_l] * num_hidden, w_final, b_final, out_ref
      x_ref:   (1, tile_n) f32   (batch on lanes)
      w_l:     (k_out, k_in)     (PyTorch (out, in) layout)
      b_l:     (k_out, 1)
      w_final: (k, 1)            (transposed (1, k) final weight)
      b_final: (1, 1)
      out_ref: (1, tile_n) f32
    """

    def kernel(*refs):
        x_ref = refs[0]
        out_ref = refs[-1]
        i = pl.program_id(0)

        rows = jax.lax.broadcasted_iota(jnp.int32, (k, tile_n), 0)
        cols = jax.lax.broadcasted_iota(jnp.int32, (k, tile_n), 1) + i * tile_n
        elem = (cols * k + rows).astype(jnp.uint32)  # padding-independent counter

        x = x_ref[...].astype(jnp.float32)           # (1, tile_n)
        h = None
        idx = 1
        for l in range(num_hidden):
            w_ref, b_ref = refs[idx], refs[idx + 1]
            idx += 2
            if l == 0:
                # in_features == 1: outer product on the VPU (no K=1 MXU matmul).
                h = w_ref[...].astype(jnp.float32) * x          # (k,1)*(1,tn) -> (k,tn)
            else:
                h = jnp.dot(w_ref[...], h.astype(w_ref.dtype),
                            preferred_element_type=jnp.float32)  # (k,k)@(k,tn) on MXU
            h = h + b_ref[...].astype(jnp.float32)               # (k,1) lane-broadcast
            h = jnp.maximum(h, 0.0)                              # ReLU
            counter = elem + jnp.uint32(_layer_seed(base_seed, l))
            h = h * _keep_mask(counter, keep_prob)               # MCDropout (in-kernel)

        wf_ref, bf_ref = refs[idx], refs[idx + 1]
        # Final (1, k) layer as multiply + sublane reduction (no M=1 MXU matmul).
        out = jnp.sum(wf_ref[...].astype(jnp.float32) * h, axis=0, keepdims=True)
        out_ref[...] = out + bf_ref[...].astype(jnp.float32)

    return kernel


def bnn_forward_pallas(x, params, *, p=0.5, seed=0, tile_n=None,
                       compute_dtype=jnp.float32):
    """Fused Pallas forward for the BNN-regression MLP.

    x:      (N, 1) float32 (same layout as the PyTorch module input)
    params: list of (W, b), W: (out, in), b: (out, 1) — PyTorch nn.Linear layout.
            len == L + 2; first layer in=1, last layer out=1.
    p:      MC-dropout probability (applied after every hidden block).
    compute_dtype: jnp.float32 everywhere, or jnp.bfloat16 for weights / MXU
                   inputs (recommended on v6e / v7x).
    Returns (N, 1) float32.
    """
    assert 0.0 <= p < 1.0
    N = x.shape[0]
    num_hidden = len(params) - 1
    k = params[0][0].shape[0]

    # Tiling: large lane tiles amortize the ~0.35us per-grid-step overhead;
    # keep >= 2 parallel steps when N allows so both v7x TensorCores get work.
    if tile_n is None:
        if N >= 1024:
            tile_n = 512
        elif N >= 256:
            tile_n = 128 * max(1, (N // 2) // 128)
        else:
            tile_n = 128
    n_pad = pl.cdiv(N, tile_n) * tile_n

    # Feature-major, lane-dense layout: batch on lanes, zero-padded to the tile.
    x_row = jnp.zeros((1, n_pad), jnp.float32).at[:, :N].set(x.astype(jnp.float32).T)

    keep_prob = 1.0 - p
    kernel = _make_mlp_kernel(num_hidden, k, tile_n, keep_prob, seed)

    inputs = [x_row]
    in_specs = [pl.BlockSpec((1, tile_n), lambda i: (0, i))]
    for l in range(num_hidden):
        W, b = params[l]
        inputs += [W.astype(compute_dtype), b.astype(compute_dtype)]
        in_specs += [
            pl.BlockSpec(W.shape, lambda i: (0, 0)),  # tiny weights stay resident
            pl.BlockSpec(b.shape, lambda i: (0, 0)),
        ]
    Wf, bf = params[-1]
    wf_col = Wf.astype(compute_dtype).T              # (k, 1)
    bf_sc = bf.astype(compute_dtype).reshape(1, 1)   # (1, 1)
    inputs += [wf_col, bf_sc]
    in_specs += [pl.BlockSpec(wf_col.shape, lambda i: (0, 0)),
                 pl.BlockSpec(bf_sc.shape, lambda i: (0, 0))]

    out_row = pl.pallas_call(
        kernel,
        out_shape=jax.ShapeDtypeStruct((1, n_pad), jnp.float32),
        grid=(n_pad // tile_n,),
        in_specs=in_specs,
        out_specs=pl.BlockSpec((1, tile_n), lambda i: (0, i)),
        compiler_params=pltpu.CompilerParams(dimension_semantics=("parallel",)),
    )(*inputs)

    return out_row[:, :N].T  # back to (N, 1)


def bnn_forward_ref(x, params, *, p=0.5, seed=0):
    """Pure-JAX reference using the same deterministic dropout-mask hash."""
    keep_prob = 1.0 - p
    N = x.shape[0]
    xr = x.astype(jnp.float32).T  # (1, N) feature-major
    num_hidden = len(params) - 1
    h = None
    for l in range(num_hidden):
        W, b = params[l]
        k = W.shape[0]
        if l == 0:
            h = W.astype(jnp.float32) * xr
        else:
            h = W.astype(jnp.float32) @ h
        h = jnp.maximum(h + b.astype(jnp.float32), 0.0)
        rows = jnp.arange(k, dtype=jnp.int32)[:, None]
        cols = jnp.arange(N, dtype=jnp.int32)[None, :]
        counter = (cols * k + rows).astype(jnp.uint32) + jnp.uint32(_layer_seed(seed, l))
        h = h * _keep_mask(counter, keep_prob)
    Wf, bf = params[-1]
    out = jnp.sum(Wf.astype(jnp.float32).T * h, axis=0, keepdims=True)
    out = out + bf.astype(jnp.float32)
    return out.T  # (N, 1)


def init_params(key, k, L):
    """Deterministic Gaussian init for the GaussianLinear layers (PyTorch (out,in))."""
    dims = [(k, 1)] + [(k, k)] * L + [(1, k)]
    params = []
    for (dout, din) in dims:
        key, kw, kb = jax.random.split(key, 3)
        W = jax.random.normal(kw, (dout, din), jnp.float32) / jnp.sqrt(float(din))
        b = 0.01 * jax.random.normal(kb, (dout, 1), jnp.float32)
        params.append((W, b))
    return params, key


if __name__ == "__main__":
    # l (prior scale) only affects the regularizer, not the forward pass.
    k = 32      # hidden units
    L = 2       # extra hidden blocks
    p = 0.5     # MC-dropout probability
    N = 256     # batch of scalar regression inputs
    SEED = 0

    key = jax.random.PRNGKey(0)
    key, kx = jax.random.split(key)
    x = jax.random.normal(kx, (N, 1), jnp.float32)
    params, key = init_params(key, k, L)

    ref = bnn_forward_ref(x, params, p=p, seed=SEED)

    # float32 path (works on all TPU generations).
    out = bnn_forward_pallas(x, params, p=p, seed=SEED)
    out = jax.block_until_ready(out)
    assert out.shape == (N, 1)
    assert jnp.allclose(out, ref, atol=1e-4, rtol=1e-4), "f32 mismatch vs JAX reference"

    # bf16 weights / MXU inputs (recommended on v6e / v7x; elementwise stays f32).
    out_bf16 = bnn_forward_pallas(x, params, p=p, seed=SEED,
                                  compute_dtype=jnp.bfloat16)
    out_bf16 = jax.block_until_ready(out_bf16)
    assert jnp.allclose(out_bf16, ref, atol=2e-1, rtol=2e-1), "bf16 mismatch vs reference"

    print("KERNEL_OK")
</pallas_src>

<mosaic_0001>
module attributes {stable_mosaic.version = 11 : i64} {
  func.func @kernel(%arg0: i32, %arg1: memref<1x128xf32, #tpu.memory_space<vmem>>, %arg2: memref<32x1xf32, #tpu.memory_space<vmem>>, %arg3: memref<32x1xf32, #tpu.memory_space<vmem>>, %arg4: memref<32x32xf32, #tpu.memory_space<vmem>>, %arg5: memref<32x1xf32, #tpu.memory_space<vmem>>, %arg6: memref<32x32xf32, #tpu.memory_space<vmem>>, %arg7: memref<32x1xf32, #tpu.memory_space<vmem>>, %arg8: memref<32x1xf32, #tpu.memory_space<vmem>>, %arg9: memref<1x1xf32, #tpu.memory_space<vmem>>, %arg10: memref<1x128xf32, #tpu.memory_space<vmem>>) attributes {dimension_semantics = [#tpu.dimension_semantics<parallel>], iteration_bounds = array<i64: 2>, scalar_prefetch = 0 : i64, scratch_operands = 0 : i64, tpu.core_type = #tpu.core_type<tc>, window_params = [{transform_indices = @transform_0, window_bounds = array<i64: 1, 128>}, {pipeline_mode = #tpu.pipeline_mode<synchronous>, transform_indices = @transform_1, window_bounds = array<i64: 32, 1>}, {pipeline_mode = #tpu.pipeline_mode<synchronous>, transform_indices = @transform_2, window_bounds = array<i64: 32, 1>}, {pipeline_mode = #tpu.pipeline_mode<synchronous>, transform_indices = @transform_3, window_bounds = array<i64: 32, 32>}, {pipeline_mode = #tpu.pipeline_mode<synchronous>, transform_indices = @transform_4, window_bounds = array<i64: 32, 1>}, {pipeline_mode = #tpu.pipeline_mode<synchronous>, transform_indices = @transform_5, window_bounds = array<i64: 32, 32>}, {pipeline_mode = #tpu.pipeline_mode<synchronous>, transform_indices = @transform_6, window_bounds = array<i64: 32, 1>}, {pipeline_mode = #tpu.pipeline_mode<synchronous>, transform_indices = @transform_7, window_bounds = array<i64: 32, 1>}, {pipeline_mode = #tpu.pipeline_mode<synchronous>, transform_indices = @transform_8, window_bounds = array<i64: 1, 1>}, {transform_indices = @transform_9, window_bounds = array<i64: 1, 128>}]} {
    %0 = tpu.iota {dimensions = array<i32: 0>} : vector<32x128xi32>
    %1 = tpu.iota {dimensions = array<i32: 1>} : vector<32x128xi32>
    %c128_i32 = arith.constant 128 : i32
    %2 = arith.muli %arg0, %c128_i32 : i32
    %3 = vector.broadcast %2 : i32 to vector<32x128xi32>
    %4 = arith.addi %1, %3 : vector<32x128xi32>
    %c32_i32 = arith.constant 32 : i32
    %5 = vector.broadcast %c32_i32 : i32 to vector<32x128xi32>
    %6 = arith.muli %4, %5 : vector<32x128xi32>
    %7 = arith.addi %6, %0 : vector<32x128xi32>
    %c0 = arith.constant 0 : index
    %c0_0 = arith.constant 0 : index
    %8 = vector.load %arg1[%c0, %c0_0] : memref<1x128xf32, #tpu.memory_space<vmem>>, vector<1x128xf32>
    %c0_1 = arith.constant 0 : index
    %c0_2 = arith.constant 0 : index
    %9 = vector.load %arg2[%c0_1, %c0_2] : memref<32x1xf32, #tpu.memory_space<vmem>>, vector<32x1xf32>
    %10 = vector.broadcast %9 : vector<32x1xf32> to vector<32x128xf32>
    %11 = vector.broadcast %8 : vector<1x128xf32> to vector<32x128xf32>
    %12 = arith.mulf %10, %11 : vector<32x128xf32>
    %c0_3 = arith.constant 0 : index
    %c0_4 = arith.constant 0 : index
    %13 = vector.load %arg3[%c0_3, %c0_4] : memref<32x1xf32, #tpu.memory_space<vmem>>, vector<32x1xf32>
    %14 = vector.broadcast %13 : vector<32x1xf32> to vector<32x128xf32>
    %15 = arith.addf %12, %14 : vector<32x128xf32>
    %cst = arith.constant 0.000000e+00 : f32
    %16 = vector.broadcast %cst : f32 to vector<32x128xf32>
    %17 = arith.maximumf %15, %16 : vector<32x128xf32>
    %c-1640531535_i32 = arith.constant -1640531535 : i32
    %18 = vector.broadcast %c-1640531535_i32 : i32 to vector<32x128xi32>
    %19 = arith.addi %7, %18 : vector<32x128xi32>
    %c16_i32 = arith.constant 16 : i32
    %20 = vector.broadcast %c16_i32 : i32 to vector<32x128xi32>
    %21 = arith.shrui %19, %20 : vector<32x128xi32>
    %22 = arith.xori %19, %21 : vector<32x128xi32>
    %c2146121005_i32 = arith.constant 2146121005 : i32
    %23 = vector.broadcast %c2146121005_i32 : i32 to vector<32x128xi32>
    %24 = arith.muli %22, %23 : vector<32x128xi32>
    %c15_i32 = arith.constant 15 : i32
    %25 = vector.broadcast %c15_i32 : i32 to vector<32x128xi32>
    %26 = arith.shrui %24, %25 : vector<32x128xi32>
    %27 = arith.xori %24, %26 : vector<32x128xi32>
    %c-2073254261_i32 = arith.constant -2073254261 : i32
    %28 = vector.broadcast %c-2073254261_i32 : i32 to vector<32x128xi32>
    %29 = arith.muli %27, %28 : vector<32x128xi32>
    %c16_i32_5 = arith.constant 16 : i32
    %30 = vector.broadcast %c16_i32_5 : i32 to vector<32x128xi32>
    %31 = arith.shrui %29, %30 : vector<32x128xi32>
    %32 = arith.xori %29, %31 : vector<32x128xi32>
    %c8_i32 = arith.constant 8 : i32
    %33 = vector.broadcast %c8_i32 : i32 to vector<32x128xi32>
    %34 = arith.shrui %32, %33 : vector<32x128xi32>
    %c8388608_i32 = arith.constant 8388608 : i32
    %35 = vector.broadcast %c8388608_i32 : i32 to vector<32x128xi32>
    %36 = arith.cmpi slt, %34, %35 : vector<32x128xi32>
    %cst_6 = arith.constant 2.000000e+00 : f32
    %cst_7 = arith.constant 0.000000e+00 : f32
    %37 = vector.broadcast %cst_6 : f32 to vector<32x128xf32>
    %38 = vector.broadcast %cst_7 : f32 to vector<32x128xf32>
    %39 = arith.select %36, %37, %38 : vector<32x128xi1>, vector<32x128xf32>
    %40 = arith.mulf %17, %39 : vector<32x128xf32>
    %c0_8 = arith.constant 0 : index
    %c0_9 = arith.constant 0 : index
    %41 = vector.load %arg4[%c0_8, %c0_9] : memref<32x32xf32, #tpu.memory_space<vmem>>, vector<32x32xf32>
    %cst_10 = arith.constant dense<0.000000e+00> : vector<32x128xf32>
    %42 = tpu.matmul %41, %40, %cst_10 {dimension_numbers = #tpu.dot_dimension_numbers<[1], [0], [0], [1], [0, 0, 1, 1], [], []>} : vector<32x32xf32>, vector<32x128xf32>, vector<32x128xf32> -> vector<32x128xf32>
    %c0_11 = arith.constant 0 : index
    %c0_12 = arith.constant 0 : index
    %43 = vector.load %arg5[%c0_11, %c0_12] : memref<32x1xf32, #tpu.memory_space<vmem>>, vector<32x1xf32>
    %44 = vector.broadcast %43 : vector<32x1xf32> to vector<32x128xf32>
    %45 = arith.addf %42, %44 : vector<32x128xf32>
    %cst_13 = arith.constant 0.000000e+00 : f32
    %46 = vector.broadcast %cst_13 : f32 to vector<32x128xf32>
    %47 = arith.maximumf %45, %46 : vector<32x128xf32>
    %c1013904226_i32 = arith.constant 1013904226 : i32
    %48 = vector.broadcast %c1013904226_i32 : i32 to vector<32x128xi32>
    %49 = arith.addi %7, %48 : vector<32x128xi32>
    %c16_i32_14 = arith.constant 16 : i32
    %50 = vector.broadcast %c16_i32_14 : i32 to vector<32x128xi32>
    %51 = arith.shrui %49, %50 : vector<32x128xi32>
    %52 = arith.xori %49, %51 : vector<32x128xi32>
    %c2146121005_i32_15 = arith.constant 2146121005 : i32
    %53 = vector.broadcast %c2146121005_i32_15 : i32 to vector<32x128xi32>
    %54 = arith.muli %52, %53 : vector<32x128xi32>
    %c15_i32_16 = arith.constant 15 : i32
    %55 = vector.broadcast %c15_i32_16 : i32 to vector<32x128xi32>
    %56 = arith.shrui %54, %55 : vector<32x128xi32>
    %57 = arith.xori %54, %56 : vector<32x128xi32>
    %c-2073254261_i32_17 = arith.constant -2073254261 : i32
    %58 = vector.broadcast %c-2073254261_i32_17 : i32 to vector<32x128xi32>
    %59 = arith.muli %57, %58 : vector<32x128xi32>
    %c16_i32_18 = arith.constant 16 : i32
    %60 = vector.broadcast %c16_i32_18 : i32 to vector<32x128xi32>
    %61 = arith.shrui %59, %60 : vector<32x128xi32>
    %62 = arith.xori %59, %61 : vector<32x128xi32>
    %c8_i32_19 = arith.constant 8 : i32
    %63 = vector.broadcast %c8_i32_19 : i32 to vector<32x128xi32>
    %64 = arith.shrui %62, %63 : vector<32x128xi32>
    %c8388608_i32_20 = arith.constant 8388608 : i32
    %65 = vector.broadcast %c8388608_i32_20 : i32 to vector<32x128xi32>
    %66 = arith.cmpi slt, %64, %65 : vector<32x128xi32>
    %cst_21 = arith.constant 2.000000e+00 : f32
    %cst_22 = arith.constant 0.000000e+00 : f32
    %67 = vector.broadcast %cst_21 : f32 to vector<32x128xf32>
    %68 = vector.broadcast %cst_22 : f32 to vector<32x128xf32>
    %69 = arith.select %66, %67, %68 : vector<32x128xi1>, vector<32x128xf32>
    %70 = arith.mulf %47, %69 : vector<32x128xf32>
    %c0_23 = arith.constant 0 : index
    %c0_24 = arith.constant 0 : index
    %71 = vector.load %arg6[%c0_23, %c0_24] : memref<32x32xf32, #tpu.memory_space<vmem>>, vector<32x32xf32>
    %cst_25 = arith.constant dense<0.000000e+00> : vector<32x128xf32>
    %72 = tpu.matmul %71, %70, %cst_25 {dimension_numbers = #tpu.dot_dimension_numbers<[1], [0], [0], [1], [0, 0, 1, 1], [], []>} : vector<32x32xf32>, vector<32x128xf32>, vector<32x128xf32> -> vector<32x128xf32>
    %c0_26 = arith.constant 0 : index
    %c0_27 = arith.constant 0 : index
    %73 = vector.load %arg7[%c0_26, %c0_27] : memref<32x1xf32, #tpu.memory_space<vmem>>, vector<32x1xf32>
    %74 = vector.broadcast %73 : vector<32x1xf32> to vector<32x128xf32>
    %75 = arith.addf %72, %74 : vector<32x128xf32>
    %cst_28 = arith.constant 0.000000e+00 : f32
    %76 = vector.broadcast %cst_28 : f32 to vector<32x128xf32>
    %77 = arith.maximumf %75, %76 : vector<32x128xf32>
    %c-626627309_i32 = arith.constant -626627309 : i32
    %78 = vector.broadcast %c-626627309_i32 : i32 to vector<32x128xi32>
    %79 = arith.addi %7, %78 : vector<32x128xi32>
    %c16_i32_29 = arith.constant 16 : i32
    %80 = vector.broadcast %c16_i32_29 : i32 to vector<32x128xi32>
    %81 = arith.shrui %79, %80 : vector<32x128xi32>
    %82 = arith.xori %79, %81 : vector<32x128xi32>
    %c2146121005_i32_30 = arith.constant 2146121005 : i32
    %83 = vector.broadcast %c2146121005_i32_30 : i32 to vector<32x128xi32>
    %84 = arith.muli %82, %83 : vector<32x128xi32>
    %c15_i32_31 = arith.constant 15 : i32
    %85 = vector.broadcast %c15_i32_31 : i32 to vector<32x128xi32>
    %86 = arith.shrui %84, %85 : vector<32x128xi32>
    %87 = arith.xori %84, %86 : vector<32x128xi32>
    %c-2073254261_i32_32 = arith.constant -2073254261 : i32
    %88 = vector.broadcast %c-2073254261_i32_32 : i32 to vector<32x128xi32>
    %89 = arith.muli %87, %88 : vector<32x128xi32>
    %c16_i32_33 = arith.constant 16 : i32
    %90 = vector.broadcast %c16_i32_33 : i32 to vector<32x128xi32>
    %91 = arith.shrui %89, %90 : vector<32x128xi32>
    %92 = arith.xori %89, %91 : vector<32x128xi32>
    %c8_i32_34 = arith.constant 8 : i32
    %93 = vector.broadcast %c8_i32_34 : i32 to vector<32x128xi32>
    %94 = arith.shrui %92, %93 : vector<32x128xi32>
    %c8388608_i32_35 = arith.constant 8388608 : i32
    %95 = vector.broadcast %c8388608_i32_35 : i32 to vector<32x128xi32>
    %96 = arith.cmpi slt, %94, %95 : vector<32x128xi32>
    %cst_36 = arith.constant 2.000000e+00 : f32
    %cst_37 = arith.constant 0.000000e+00 : f32
    %97 = vector.broadcast %cst_36 : f32 to vector<32x128xf32>
    %98 = vector.broadcast %cst_37 : f32 to vector<32x128xf32>
    %99 = arith.select %96, %97, %98 : vector<32x128xi1>, vector<32x128xf32>
    %100 = arith.mulf %77, %99 : vector<32x128xf32>
    %c0_38 = arith.constant 0 : index
    %c0_39 = arith.constant 0 : index
    %101 = vector.load %arg8[%c0_38, %c0_39] : memref<32x1xf32, #tpu.memory_space<vmem>>, vector<32x1xf32>
    %102 = vector.broadcast %101 : vector<32x1xf32> to vector<32x128xf32>
    %103 = arith.mulf %102, %100 : vector<32x128xf32>
    %cst_40 = arith.constant dense<0.000000e+00> : vector<128xf32>
    %104 = vector.multi_reduction <add>, %103, %cst_40 [0] : vector<32x128xf32> to vector<128xf32>
    %105 = vector.shape_cast %104 : vector<128xf32> to vector<1x128xf32>
    %c0_41 = arith.constant 0 : index
    %c0_42 = arith.constant 0 : index
    %106 = vector.load %arg9[%c0_41, %c0_42] : memref<1x1xf32, #tpu.memory_space<vmem>>, vector<1x1xf32>
    %107 = vector.broadcast %106 : vector<1x1xf32> to vector<1x128xf32>
    %108 = arith.addf %105, %107 : vector<1x128xf32>
    %c0_43 = arith.constant 0 : index
    %c0_44 = arith.constant 0 : index
    %109 = vector.load %arg10[%c0_43, %c0_44] : memref<1x128xf32, #tpu.memory_space<vmem>>, vector<1x128xf32>
    tpu.vector_store %arg10[%c0_43, %c0_44], %108 {strides = array<i32>} : memref<1x128xf32, #tpu.memory_space<vmem>>, vector<1x128xf32>,
    return
  }
  func.func @transform_0(%arg0: i32) -> (i32, i32) {
    %c0_i32 = arith.constant 0 : i32
    %c0_i32_0 = arith.constant 0 : i32
    return %c0_i32, %arg0 : i32, i32
  }
  func.func @transform_1(%arg0: i32) -> (i32, i32) {
    %c0_i32 = arith.constant 0 : i32
    %c0_i32_0 = arith.constant 0 : i32
    %c0_i32_1 = arith.constant 0 : i32
    return %c0_i32, %c0_i32_0 : i32, i32
  }
  func.func @transform_2(%arg0: i32) -> (i32, i32) {
    %c0_i32 = arith.constant 0 : i32
    %c0_i32_0 = arith.constant 0 : i32
    %c0_i32_1 = arith.constant 0 : i32
    return %c0_i32, %c0_i32_0 : i32, i32
  }
  func.func @transform_3(%arg0: i32) -> (i32, i32) {
    %c0_i32 = arith.constant 0 : i32
    %c0_i32_0 = arith.constant 0 : i32
    %c0_i32_1 = arith.constant 0 : i32
    return %c0_i32, %c0_i32_0 : i32, i32
  }
  func.func @transform_4(%arg0: i32) -> (i32, i32) {
    %c0_i32 = arith.constant 0 : i32
    %c0_i32_0 = arith.constant 0 : i32
    %c0_i32_1 = arith.constant 0 : i32
    return %c0_i32, %c0_i32_0 : i32, i32
  }
  func.func @transform_5(%arg0: i32) -> (i32, i32) {
    %c0_i32 = arith.constant 0 : i32
    %c0_i32_0 = arith.constant 0 : i32
    %c0_i32_1 = arith.constant 0 : i32
    return %c0_i32, %c0_i32_0 : i32, i32
  }
  func.func @transform_6(%arg0: i32) -> (i32, i32) {
    %c0_i32 = arith.constant 0 : i32
    %c0_i32_0 = arith.constant 0 : i32
    %c0_i32_1 = arith.constant 0 : i32
    return %c0_i32, %c0_i32_0 : i32, i32
  }
  func.func @transform_7(%arg0: i32) -> (i32, i32) {
    %c0_i32 = arith.constant 0 : i32
    %c0_i32_0 = arith.constant 0 : i32
    %c0_i32_1 = arith.constant 0 : i32
    return %c0_i32, %c0_i32_0 : i32, i32
  }
  func.func @transform_8(%arg0: i32) -> (i32, i32) {
    %c0_i32 = arith.constant 0 : i32
    %c0_i32_0 = arith.constant 0 : i32
    %c0_i32_1 = arith.constant 0 : i32
    return %c0_i32, %c0_i32_0 : i32, i32
  }
  func.func @transform_9(%arg0: i32) -> (i32, i32) {
    %c0_i32 = arith.constant 0 : i32
    %c0_i32_0 = arith.constant 0 : i32
    return %c0_i32, %arg0 : i32, i32
  }
}

</mosaic_0001>

<llo_original>
// kernel: tpu_custom_call.1
$region0: #{tpu_custom_call.1}
  #allocation0 [shape = 'u32[]', space=smem, size = 0x4, offset = 0x4, fixed_abs, tag = 'smem constant byte address 0x4 - core index']
  #allocation1 [shape = 'u32[72,128]{1,0:T(1,128)}', space=vmem, size = 0x9000, scoped, tag = 'internal scratch']
  #allocation2 [shape = 'f32[1,1]{1,0:T(1,128)S(1)}', space=vmem, size = 0x200, scoped, tag = 'scoped memory for tpu_custom_call.1']
  %s0 = inlined_call_operand.vmem [shape: f32[1,256], index: 0, kind: input, shape index: {}]
  %s1 = inlined_call_operand.vmem [shape: f32[32,1], index: 1, kind: input, shape index: {}]
  %s2 = inlined_call_operand.vmem [shape: f32[32,1], index: 2, kind: input, shape index: {}]
  %s3 = inlined_call_operand.vmem [shape: f32[32,32], index: 3, kind: input, shape index: {}]
  %s4 = inlined_call_operand.vmem [shape: f32[32,1], index: 4, kind: input, shape index: {}]
  %s5 = inlined_call_operand.vmem [shape: f32[32,32], index: 5, kind: input, shape index: {}]
  %s6 = inlined_call_operand.vmem [shape: f32[32,1], index: 6, kind: input, shape index: {}]
  %s7 = inlined_call_operand.vmem [shape: f32[32,1], index: 7, kind: input, shape index: {}]
  %s8 = inlined_call_operand.<no memory space> [shape: f32[1,1], index: 8, kind: input, shape index: {}]
  %s9 = inlined_call_operand.hbm [shape: f32[1,256], index: 9, kind: output, shape index: {}]
  %s10 = sld [smem:[#allocation0]]
  $region69: #{tpu_custom_call.1} parent=0
    _
  %s12 = ssub.s32 1, %s10
  %s13 = scalar_select 0, %s12, %s10
  %v14 = vstv %s8
  %15 = vst [vmem:[#allocation2] sm:$0x1] %v14
  $region1: #{tpu_custom_call.1} parent=0
    #allocation3 [shape = 'u8[1024]{0}', space=vmem, size = 0x400, scoped, tag = 'output window, operand 0']
    #allocation4 [shape = 's32[2]{0}', space=sflag, size = 0x8, scoped, tag = 'scoped memory for tpu_custom_call.1']
    %16 = vsyncpa [#allocation4], 0
    %s17 = scalar_lea.sflag [#allocation4], 1
    %18 = vsyncpa %s17, 0
    loop: start=0, step=1, limit=4
    $region2: #{tpu_custom_call.1} parent=1 // loop_pre_header
      _
    $region3: #{tpu_custom_call.1} parent=1 // loop_header
      %s20 = sphi 0, %s24
      %p21 = scmp.ge.s32.totalorder %s20, 4
      %s30 = sphi 0, %s32
      %s33 = sphi 0, %s30
      %s34 = sphi 0, %s33
      %s50 = sphi 0, %s34
      %s54 = sphi 0, %s54
      %s56 = sphi 0, %s54
      %s57 = sphi 0, %s56
      %s71 = sphi 0, %s57
      %s75 = sphi 0, %s75
      %s77 = sphi 0, %s75
      %s78 = sphi 0, %s77
      %s92 = sphi 0, %s78
      %s96 = sphi 0, %s96
      %s98 = sphi 0, %s96
      %s99 = sphi 0, %s98
      %s113 = sphi 0, %s99
      %s117 = sphi 0, %s117
      %s119 = sphi 0, %s117
      %s120 = sphi 0, %s119
      %s134 = sphi 0, %s120
      %s138 = sphi 0, %s138
      %s140 = sphi 0, %s138
      %s141 = sphi 0, %s140
      %s155 = sphi 0, %s141
      %s159 = sphi 0, %s159
      %s161 = sphi 0, %s159
      %s162 = sphi 0, %s161
      %s176 = sphi 0, %s162
      %s180 = sphi 0, %s180
      %s182 = sphi 0, %s180
      %s183 = sphi 0, %s182
      %s197 = sphi 0, %s183
      %s201 = sphi 0, %s201
      %s203 = sphi 0, %s201
      %s204 = sphi 0, %s203
      %s218 = sphi 0, %s204
      %s224 = sphi 0, %s226
      %s227 = sphi 0, %s224
      %s228 = sphi 0, %s227
      %s244 = sphi 0, %s228
    $region4: #{tpu_custom_call.1} parent=1 // loop_header_branch
      %23 = sbr.rel (%p21) target = $region8
    $region5: #{tpu_custom_call.1} parent=1 // loop_body
      %s25 = ssub.s32 %s20, 1
      %s26 = ssub.s32 %s20, 2
      %s27 = sadd.s32 %s20, 1
      %s28 = ssub.s32 %s20, %s27
      %p29 = scmp.eq.s32.totalorder %s28, 0
      %s31 = sadd.s32 %s30, 1
      %s32 = scalar_select %p29, %s30, %s31
      %p35 = pneg %p29
      %p36 = scmp.eq.s32.totalorder %s20, 1
      %p37 = por %p35, %p36
      %p38 = scmp.ne.s32.totalorder %s30, %s33
      %p39 = scmp.eq.s32.totalorder %s20, 0
      %p40 = por %p38, %p39
      %p41 = scmp.ne.s32.totalorder %s30, %s33
      %p42 = scmp.eq.s32.totalorder %s25, 1
      %p43 = por %p41, %p42
      %p44 = scmp.ne.s32.totalorder %s33, %s34
      %p45 = scmp.eq.s32.totalorder %s25, 0
      %p46 = por %p44, %p45
      %p47 = scmp.ne.s32.totalorder %s33, %s34
      %p48 = scmp.eq.s32.totalorder %s26, 1
      %p49 = por %p47, %p48
      %p51 = scmp.ne.s32.totalorder %s34, %s50
      %p52 = scmp.eq.s32.totalorder %s26, 0
      %p53 = por %p51, %p52
      %s55 = sadd.s32 %s54, 1
      %p58 = scmp.eq.s32.totalorder %s20, 1
      %p59 = scmp.ne.s32.totalorder %s54, %s56
      %p60 = scmp.eq.s32.totalorder %s20, 0
      %p61 = por %p59, %p60
      %p62 = scmp.ne.s32.totalorder %s54, %s56
      %p63 = scmp.eq.s32.totalorder %s25, 1
      %p64 = por %p62, %p63
      %p65 = scmp.ne.s32.totalorder %s56, %s57
      %p66 = scmp.eq.s32.totalorder %s25, 0
      %p67 = por %p65, %p66
      %p68 = scmp.ne.s32.totalorder %s56, %s57
      %p69 = scmp.eq.s32.totalorder %s26, 1
      %p70 = por %p68, %p69
      %p72 = scmp.ne.s32.totalorder %s57, %s71
      %p73 = scmp.eq.s32.totalorder %s26, 0
      %p74 = por %p72, %p73
      %s76 = sadd.s32 %s75, 1
      %p79 = scmp.eq.s32.totalorder %s20, 1
      %p80 = scmp.ne.s32.totalorder %s75, %s77
      %p81 = scmp.eq.s32.totalorder %s20, 0
      %p82 = por %p80, %p81
      %p83 = scmp.ne.s32.totalorder %s75, %s77
      %p84 = scmp.eq.s32.totalorder %s25, 1
      %p85 = por %p83, %p84
      %p86 = scmp.ne.s32.totalorder %s77, %s78
      %p87 = scmp.eq.s32.totalorder %s25, 0
      %p88 = por %p86, %p87
      %p89 = scmp.ne.s32.totalorder %s77, %s78
      %p90 = scmp.eq.s32.totalorder %s26, 1
      %p91 = por %p89, %p90
      %p93 = scmp.ne.s32.totalorder %s78, %s92
      %p94 = scmp.eq.s32.totalorder %s26, 0
      %p95 = por %p93, %p94
      %s97 = sadd.s32 %s96, 1
      %p100 = scmp.eq.s32.totalorder %s20, 1
      %p101 = scmp.ne.s32.totalorder %s96, %s98
      %p102 = scmp.eq.s32.totalorder %s20, 0
      %p103 = por %p101, %p102
      %p104 = scmp.ne.s32.totalorder %s96, %s98
      %p105 = scmp.eq.s32.totalorder %s25, 1
      %p106 = por %p104, %p105
      %p107 = scmp.ne.s32.totalorder %s98, %s99
      %p108 = scmp.eq.s32.totalorder %s25, 0
      %p109 = por %p107, %p108
      %p110 = scmp.ne.s32.totalorder %s98, %s99
      %p111 = scmp.eq.s32.totalorder %s26, 1
      %p112 = por %p110, %p111
      %p114 = scmp.ne.s32.totalorder %s99, %s113
      %p115 = scmp.eq.s32.totalorder %s26, 0
      %p116 = por %p114, %p115
      %s118 = sadd.s32 %s117, 1
      %p121 = scmp.eq.s32.totalorder %s20, 1
      %p122 = scmp.ne.s32.totalorder %s117, %s119
      %p123 = scmp.eq.s32.totalorder %s20, 0
      %p124 = por %p122, %p123
      %p125 = scmp.ne.s32.totalorder %s117, %s119
      %p126 = scmp.eq.s32.totalorder %s25, 1
      %p127 = por %p125, %p126
      %p128 = scmp.ne.s32.totalorder %s119, %s120
      %p129 = scmp.eq.s32.totalorder %s25, 0
      %p130 = por %p128, %p129
      %p131 = scmp.ne.s32.totalorder %s119, %s120
      %p132 = scmp.eq.s32.totalorder %s26, 1
      %p133 = por %p131, %p132
      %p135 = scmp.ne.s32.totalorder %s120, %s134
      %p136 = scmp.eq.s32.totalorder %s26, 0
      %p137 = por %p135, %p136
      %s139 = sadd.s32 %s138, 1
      %p142 = scmp.eq.s32.totalorder %s20, 1
      %p143 = scmp.ne.s32.totalorder %s138, %s140
      %p144 = scmp.eq.s32.totalorder %s20, 0
      %p145 = por %p143, %p144
      %p146 = scmp.ne.s32.totalorder %s138, %s140
      %p147 = scmp.eq.s32.totalorder %s25, 1
      %p148 = por %p146, %p147
      %p149 = scmp.ne.s32.totalorder %s140, %s141
      %p150 = scmp.eq.s32.totalorder %s25, 0
      %p151 = por %p149, %p150
      %p152 = scmp.ne.s32.totalorder %s140, %s141
      %p153 = scmp.eq.s32.totalorder %s26, 1
      %p154 = por %p152, %p153
      %p156 = scmp.ne.s32.totalorder %s141, %s155
      %p157 = scmp.eq.s32.totalorder %s26, 0
      %p158 = por %p156, %p157
      %s160 = sadd.s32 %s159, 1
      %p163 = scmp.eq.s32.totalorder %s20, 1
      %p164 = scmp.ne.s32.totalorder %s159, %s161
      %p165 = scmp.eq.s32.totalorder %s20, 0
      %p166 = por %p164, %p165
      %p167 = scmp.ne.s32.totalorder %s159, %s161
      %p168 = scmp.eq.s32.totalorder %s25, 1
      %p169 = por %p167, %p168
      %p170 = scmp.ne.s32.totalorder %s161, %s162
      %p171 = scmp.eq.s32.totalorder %s25, 0
      %p172 = por %p170, %p171
      %p173 = scmp.ne.s32.totalorder %s161, %s162
      %p174 = scmp.eq.s32.totalorder %s26, 1
      %p175 = por %p173, %p174
      %p177 = scmp.ne.s32.totalorder %s162, %s176
      %p178 = scmp.eq.s32.totalorder %s26, 0
      %p179 = por %p177, %p178
      %s181 = sadd.s32 %s180, 1
      %p184 = scmp.eq.s32.totalorder %s20, 1
      %p185 = scmp.ne.s32.totalorder %s180, %s182
      %p186 = scmp.eq.s32.totalorder %s20, 0
      %p187 = por %p185, %p186
      %p188 = scmp.ne.s32.totalorder %s180, %s182
      %p189 = scmp.eq.s32.totalorder %s25, 1
      %p190 = por %p188, %p189
      %p191 = scmp.ne.s32.totalorder %s182, %s183
      %p192 = scmp.eq.s32.totalorder %s25, 0
      %p193 = por %p191, %p192
      %p194 = scmp.ne.s32.totalorder %s182, %s183
      %p195 = scmp.eq.s32.totalorder %s26, 1
      %p196 = por %p194, %p195
      %p198 = scmp.ne.s32.totalorder %s183, %s197
      %p199 = scmp.eq.s32.totalorder %s26, 0
      %p200 = por %p198, %p199
      %s202 = sadd.s32 %s201, 1
      %p205 = scmp.eq.s32.totalorder %s20, 1
      %p206 = scmp.ne.s32.totalorder %s201, %s203
      %p207 = scmp.eq.s32.totalorder %s20, 0
      %p208 = por %p206, %p207
      %p209 = scmp.ne.s32.totalorder %s201, %s203
      %p210 = scmp.eq.s32.totalorder %s25, 1
      %p211 = por %p209, %p210
      %p212 = scmp.ne.s32.totalorder %s203, %s204
      %p213 = scmp.eq.s32.totalorder %s25, 0
      %p214 = por %p212, %p213
      %p215 = scmp.ne.s32.totalorder %s203, %s204
      %p216 = scmp.eq.s32.totalorder %s26, 1
      %p217 = por %p215, %p216
      %p219 = scmp.ne.s32.totalorder %s204, %s218
      %p220 = scmp.eq.s32.totalorder %s26, 0
      %p221 = por %p219, %p220
      %s222 = ssub.s32 %s20, %s27
      %p223 = scmp.eq.s32.totalorder %s222, 0
      %s225 = sadd.s32 %s224, 1
      %s226 = scalar_select %p223, %s224, %s225
      %p229 = pneg %p223
      %p230 = scmp.eq.s32.totalorder %s20, 1
      %p231 = por %p229, %p230
      %p232 = scmp.ne.s32.totalorder %s224, %s227
      %p233 = scmp.eq.s32.totalorder %s20, 0
      %p234 = por %p232, %p233
      %p235 = scmp.ne.s32.totalorder %s224, %s227
      %p236 = scmp.eq.s32.totalorder %s25, 1
      %p237 = por %p235, %p236
      %p238 = scmp.ne.s32.totalorder %s227, %s228
      %p239 = scmp.eq.s32.totalorder %s25, 0
      %p240 = por %p238, %p239
      %p241 = scmp.ne.s32.totalorder %s227, %s228
      %p242 = scmp.eq.s32.totalorder %s26, 1
      %p243 = por %p241, %p242
      %p245 = scmp.ne.s32.totalorder %s228, %s244
      %p246 = scmp.eq.s32.totalorder %s26, 0
      %p247 = por %p245, %p246
      %p248 = scmp.le.s32.totalorder 1, %s20
      %p249 = scmp.lt.s32.totalorder %s20, 3
      %p250 = pnand %p248, %p249
      %p251 = pneg %p250
      // Predicated region
      $region9: #{tpu_custom_call.1} parent=5 // pred_check
        _
      $region10: #{tpu_custom_call.1} parent=5 // pred_check_branch
        %253 = sbr.rel (%p250) target = $region12
      $region11: #{tpu_custom_call.1} parent=5 // pred_region
        %s254 = ssub.s32 %s20, 1
        // Predicated region
        $region13: #{tpu_custom_call.1} parent=11 // pred_check
          %p255 = pneg %p67
        $region14: #{tpu_custom_call.1} parent=11 // pred_check_branch
          %257 = sbr.rel (%p255) target = $region16
        $region15: #{tpu_custom_call.1} parent=11 // pred_region
          _
        $region16: #{tpu_custom_call.1} parent=11 // pred_fallthru
          _
        // Predicated region
        $region17: #{tpu_custom_call.1} parent=11 // pred_check
          %p258 = pneg %p88
        $region18: #{tpu_custom_call.1} parent=11 // pred_check_branch
          %260 = sbr.rel (%p258) target = $region20
        $region19: #{tpu_custom_call.1} parent=11 // pred_region
          _
        $region20: #{tpu_custom_call.1} parent=11 // pred_fallthru
          _
        // Predicated region
        $region21: #{tpu_custom_call.1} parent=11 // pred_check
          %p261 = pneg %p109
        $region22: #{tpu_custom_call.1} parent=11 // pred_check_branch
          %263 = sbr.rel (%p261) target = $region24
        $region23: #{tpu_custom_call.1} parent=11 // pred_region
          _
        $region24: #{tpu_custom_call.1} parent=11 // pred_fallthru
          _
        // Predicated region
        $region25: #{tpu_custom_call.1} parent=11 // pred_check
          %p264 = pneg %p130
        $region26: #{tpu_custom_call.1} parent=11 // pred_check_branch
          %266 = sbr.rel (%p264) target = $region28
        $region27: #{tpu_custom_call.1} parent=11 // pred_region
          _
        $region28: #{tpu_custom_call.1} parent=11 // pred_fallthru
          _
        // Predicated region
        $region29: #{tpu_custom_call.1} parent=11 // pred_check
          %p267 = pneg %p151
        $region30: #{tpu_custom_call.1} parent=11 // pred_check_branch
          %269 = sbr.rel (%p267) target = $region32
        $region31: #{tpu_custom_call.1} parent=11 // pred_region
          _
        $region32: #{tpu_custom_call.1} parent=11 // pred_fallthru
          _
        // Predicated region
        $region33: #{tpu_custom_call.1} parent=11 // pred_check
          %p270 = pneg %p172
        $region34: #{tpu_custom_call.1} parent=11 // pred_check_branch
          %272 = sbr.rel (%p270) target = $region36
        $region35: #{tpu_custom_call.1} parent=11 // pred_region
          _
        $region36: #{tpu_custom_call.1} parent=11 // pred_fallthru
          _
        // Predicated region
        $region37: #{tpu_custom_call.1} parent=11 // pred_check
          %p273 = pneg %p193
        $region38: #{tpu_custom_call.1} parent=11 // pred_check_branch
          %275 = sbr.rel (%p273) target = $region40
        $region39: #{tpu_custom_call.1} parent=11 // pred_region
          _
        $region40: #{tpu_custom_call.1} parent=11 // pred_fallthru
          _
        // Predicated region
        $region41: #{tpu_custom_call.1} parent=11 // pred_check
          %p276 = pneg %p214
        $region42: #{tpu_custom_call.1} parent=11 // pred_check_branch
          %278 = sbr.rel (%p276) target = $region44
        $region43: #{tpu_custom_call.1} parent=11 // pred_region
          _
        $region44: #{tpu_custom_call.1} parent=11 // pred_fallthru
          _
      $region12: #{tpu_custom_call.1} parent=5 // pred_fallthru
        _
      %p279 = scmp.lt.s32.totalorder %s20, 2
      // Predicated region
      $region45: #{tpu_custom_call.1} parent=5 // pred_check
        %p280 = pneg %p279
      $region46: #{tpu_custom_call.1} parent=5 // pred_check_branch
        %282 = sbr.rel (%p280) target = $region48
      $region47: #{tpu_custom_call.1} parent=5 // pred_region
        // Predicated region
        $region49: #{tpu_custom_call.1} parent=47 // pred_check
          %p283 = pneg %p40
        $region50: #{tpu_custom_call.1} parent=47 // pred_check_branch
          %285 = sbr.rel (%p283) target = $region52
        $region51: #{tpu_custom_call.1} parent=47 // pred_region
          %p286 = scmp.lt.s32.totalorder %s20, 1
          %s287 = scalar_select %p286, %s20, 1
          %s288 = scalar_lea.vmem %s0, %s287
        $region52: #{tpu_custom_call.1} parent=47 // pred_fallthru
          _
      $region48: #{tpu_custom_call.1} parent=5 // pred_fallthru
        _
      %p289 = scmp.le.s32.totalorder 1, %s20
      %p290 = scmp.lt.s32.totalorder %s20, 3
      %p291 = pnand %p289, %p290
      %p292 = pneg %p291
      // Predicated region
      $region53: #{tpu_custom_call.1} parent=5 // pred_check
        _
      $region54: #{tpu_custom_call.1} parent=5 // pred_check_branch
        %294 = sbr.rel (%p291) target = $region56
      $region55: #{tpu_custom_call.1} parent=5 // pred_region
        %s295 = ssub.s32 %s20, 1
        %p296 = scmp.lt.s32.totalorder %s25, 1
        %s297 = scalar_select %p296, %s25, 1
        %s298 = scalar_lea.vmem %s0, %s297
        %p299 = pneg %p46
        %p300 = pneg %p43
        %p301 = pneg %p67
        %p302 = pneg %p64
        %p303 = pneg %p88
        %p304 = pneg %p85
        %p305 = pneg %p109
        %p306 = pneg %p106
        %p307 = pneg %p130
        %p308 = pneg %p127
        %p309 = pneg %p151
        %p310 = pneg %p148
        %p311 = pneg %p172
        %p312 = pneg %p169
        %p313 = pneg %p193
        %p314 = pneg %p190
        %p315 = pneg %p214
        %p316 = pneg %p211
        %p317 = pneg %p240
        %p318 = pneg %p237
        %s319 = sand.u32 %s227, 1
        %s320 = scalar_lea.sflag [#allocation4], %s319
        %s321 = sand.u32 %s227, 1
        %s322 = scalar_lea.vmem [#allocation3], %s321
        %p323 = scmp.lt.s32.totalorder %s25, 1
        %s324 = scalar_select %p323, %s25, 1
        %s325 = scalar_lea.vmem %s0, %s324
        %v326 = vlaneseq
        %v327 = vshrl.u32 %v326, 7
        %v328 = vadd.s32 %v327, 8
        %v329 = vadd.s32 %v327, 16
        %v330 = vadd.s32 %v327, 24
        %v331 = vlaneseq
        %v332 = vand.u32 %v331, 127
        %s333 = smul.u32 %s25, 128
        %v334 = vstv %s333
        %v335 = vadd.s32 %v332, %v334
        %v336 = vmul.u32 %v335, 32
        %v337 = vadd.s32 %v336, %v327
        %v338 = vadd.s32 %v336, %v328
        %v339 = vadd.s32 %v336, %v329
        %v340 = vadd.s32 %v336, %v330
        %v341 = vld [vmem:[%s325] sm:$0x1]
        %v342 = vld [vmem:[%s1] sm:$0xff]
        %v343 = vld [vmem:[%s1 + $0x8] sm:$0xff]
        %v344 = vld [vmem:[%s1 + $0x10] sm:$0xff]
        %v345 = vld [vmem:[%s1 + $0x18] sm:$0xff]
        %347 = vset.pattern.permute.xlu0 0
        %348 = vperm.xlu0 %347, %v342
        %v349 = vpop.permute.xlu0 %348
        %352 = vset.pattern.permute.xlu0 0
        %353 = vperm.xlu0 %352, %v343
        %v354 = vpop.permute.xlu0 %353
        %357 = vset.pattern.permute.xlu0 0
        %358 = vperm.xlu0 %357, %v344
        %v359 = vpop.permute.xlu0 %358
        %362 = vset.pattern.permute.xlu0 0
        %363 = vperm.xlu0 %362, %v345
        %v364 = vpop.permute.xlu0 %363
        %v367 = vperm.slane %v341, 0
        %v369 = vmul.f32 %v349, %v367
        %v370 = vmul.f32 %v354, %v367
        %v371 = vmul.f32 %v359, %v367
        %v372 = vmul.f32 %v364, %v367
        %v373 = vld [vmem:[%s2] sm:$0xff]
        %v374 = vld [vmem:[%s2 + $0x8] sm:$0xff]
        %v375 = vld [vmem:[%s2 + $0x10] sm:$0xff]
        %v376 = vld [vmem:[%s2 + $0x18] sm:$0xff]
        %378 = vset.pattern.permute.xlu0 0
        %379 = vperm.xlu0 %378, %v373
        %v380 = vpop.permute.xlu0 %379
        %383 = vset.pattern.permute.xlu0 0
        %384 = vperm.xlu0 %383, %v374
        %v385 = vpop.permute.xlu0 %384
        %388 = vset.pattern.permute.xlu0 0
        %389 = vperm.xlu0 %388, %v375
        %v390 = vpop.permute.xlu0 %389
        %393 = vset.pattern.permute.xlu0 0
        %394 = vperm.xlu0 %393, %v376
        %v395 = vpop.permute.xlu0 %394
        %v397 = vadd.f32 %v369, %v380
        %v398 = vadd.f32 %v370, %v385
        %v399 = vadd.f32 %v371, %v390
        %v400 = vadd.f32 %v372, %v395
        %v401 = vmax.f32 %v397, 0.0
        %v402 = vmax.f32 %v398, 0.0
        %v403 = vmax.f32 %v399, 0.0
        %v404 = vmax.f32 %v400, 0.0
        %v405 = vadd.s32 %v337, 2654435761
        %v406 = vadd.s32 %v338, 2654435761
        %v407 = vadd.s32 %v339, 2654435761
        %v408 = vadd.s32 %v340, 2654435761
        %v409 = vshrl.u32 %v405, 16
        %v410 = vshrl.u32 %v406, 16
        %v411 = vshrl.u32 %v407, 16
        %v412 = vshrl.u32 %v408, 16
        %v413 = vxor.u32 %v405, %v409
        %v414 = vxor.u32 %v406, %v410
        %v415 = vxor.u32 %v407, %v411
        %v416 = vxor.u32 %v408, %v412
        %v417 = vmul.u32 %v413, 2146121005
        %v418 = vmul.u32 %v414, 2146121005
        %v419 = vmul.u32 %v415, 2146121005
        %v420 = vmul.u32 %v416, 2146121005
        %v421 = vshrl.u32 %v417, 15
        %v422 = vshrl.u32 %v418, 15
        %v423 = vshrl.u32 %v419, 15
        %v424 = vshrl.u32 %v420, 15
        %v425 = vxor.u32 %v417, %v421
        %v426 = vxor.u32 %v418, %v422
        %v427 = vxor.u32 %v419, %v423
        %v428 = vxor.u32 %v420, %v424
        %v429 = vmul.u32 %v425, 2221713035
        %v430 = vmul.u32 %v426, 2221713035
        %v431 = vmul.u32 %v427, 2221713035
        %v432 = vmul.u32 %v428, 2221713035
        %v433 = vshrl.u32 %v429, 16
        %v434 = vshrl.u32 %v430, 16
        %v435 = vshrl.u32 %v431, 16
        %v436 = vshrl.u32 %v432, 16
        %v437 = vxor.u32 %v429, %v433
        %v438 = vxor.u32 %v430, %v434
        %v439 = vxor.u32 %v431, %v435
        %v440 = vxor.u32 %v432, %v436
        %v441 = vshrl.u32 %v437, 8
        %v442 = vshrl.u32 %v438, 8
        %v443 = vshrl.u32 %v439, 8
        %v444 = vshrl.u32 %v440, 8
        %vm445 = vcmp.lt.s32.totalorder %v441, 8388608
        %vm446 = vcmp.lt.s32.totalorder %v442, 8388608
        %vm447 = vcmp.lt.s32.totalorder %v443, 8388608
        %vm448 = vcmp.lt.s32.totalorder %v444, 8388608
        %v449 = vsel %vm445, 2.0, 0.0
        %v450 = vsel %vm446, 2.0, 0.0
        %v451 = vsel %vm447, 2.0, 0.0
        %v452 = vsel %vm448, 2.0, 0.0
        %v453 = vmul.f32 %v401, %v449
        %v454 = vmul.f32 %v402, %v450
        %v455 = vmul.f32 %v403, %v451
        %v456 = vmul.f32 %v404, %v452
        %v457 = vld [vmem:[%s3] sm:$0xff]
        %v458 = vld [vmem:[%s3 + $0x8] sm:$0xff]
        %v459 = vld [vmem:[%s3 + $0x10] sm:$0xff]
        %v460 = vld [vmem:[%s3 + $0x18] sm:$0xff]
        %v461 = vld [vmem:[%s4] sm:$0xff]
        %v462 = vld [vmem:[%s4 + $0x8] sm:$0xff]
        %v463 = vld [vmem:[%s4 + $0x10] sm:$0xff]
        %v464 = vld [vmem:[%s4 + $0x18] sm:$0xff]
        %466 = vset.pattern.permute.xlu0 0
        %467 = vperm.xlu0 %466, %v461
        %v468 = vpop.permute.xlu0 %467
        %471 = vset.pattern.permute.xlu0 0
        %472 = vperm.xlu0 %471, %v462
        %v473 = vpop.permute.xlu0 %472
        %476 = vset.pattern.permute.xlu0 0
        %477 = vperm.xlu0 %476, %v463
        %v478 = vpop.permute.xlu0 %477
        %481 = vset.pattern.permute.xlu0 0
        %482 = vperm.xlu0 %481, %v464
        %v483 = vpop.permute.xlu0 %482
        %vm485 = vcmask 261120
        %v487 = vsel %vm485, %v457, 0
        %v490 = vsel %vm485, %v458, 0
        %v493 = vsel %vm485, %v459, 0
        %v496 = vsel %vm485, %v460, 0
        %498 = vmatpush.msra.mxu0 0.0
        %499 = vmatpush.msra.mxu0 0.0
        %500 = vmatpush.msra.mxu0 0.0
        %501 = vmatpush.msra.mxu0 0.0
        %502 = vmatpush.msra.mxu0 0.0
        %503 = vmatpush.msra.mxu0 0.0
        %504 = vmatpush.msra.mxu0 0.0
        %505 = vmatpush.msra.mxu0 0.0
        %506 = vmatpush.msra.mxu0 0.0
        %507 = vmatpush.msra.mxu0 0.0
        %508 = vmatpush.msra.mxu0 0.0
        %509 = vmatpush.msra.mxu0 0.0
        %510 = vmatpush.msra.mxu0 %v456
        %511 = vmatpush.msra.mxu0 %v455
        %512 = vmatpush.msra.mxu0 %v454
        %513 = vmatpush.msra.mxu0 %v453
        %514 = vmatmul.f32.gmra.mxu0 %v487
        %v515 = vpop.f32.mrf.mxu0
        %v516 = vadd.f32 %v468, %v515
        %517 = vmatmul.f32.gmra.mxu0 %v490
        %v518 = vpop.f32.mrf.mxu0
        %v519 = vadd.f32 %v473, %v518
        %520 = vmatmul.f32.gmra.mxu0 %v493
        %v521 = vpop.f32.mrf.mxu0
        %v522 = vadd.f32 %v478, %v521
        %523 = vmatmul.f32.gmra.mxu0 %v496
        %v524 = vpop.f32.mrf.mxu0
        %v525 = vadd.f32 %v483, %v524
        %526 = vdwg.mxu0
        %v527 = vmax.f32 %v516, 0.0
        %v528 = vmax.f32 %v519, 0.0
        %v529 = vmax.f32 %v522, 0.0
        %v530 = vmax.f32 %v525, 0.0
        %v531 = vadd.s32 %v337, 1013904226
        %v532 = vadd.s32 %v338, 1013904226
        %v533 = vadd.s32 %v339, 1013904226
        %v534 = vadd.s32 %v340, 1013904226
        %v535 = vshrl.u32 %v531, 16
        %v536 = vshrl.u32 %v532, 16
        %v537 = vshrl.u32 %v533, 16
        %v538 = vshrl.u32 %v534, 16
        %v539 = vxor.u32 %v531, %v535
        %v540 = vxor.u32 %v532, %v536
        %v541 = vxor.u32 %v533, %v537
        %v542 = vxor.u32 %v534, %v538
        %v543 = vmul.u32 %v539, 2146121005
        %v544 = vmul.u32 %v540, 2146121005
        %v545 = vmul.u32 %v541, 2146121005
        %v546 = vmul.u32 %v542, 2146121005
        %v547 = vshrl.u32 %v543, 15
        %v548 = vshrl.u32 %v544, 15
        %v549 = vshrl.u32 %v545, 15
        %v550 = vshrl.u32 %v546, 15
        %v551 = vxor.u32 %v543, %v547
        %v552 = vxor.u32 %v544, %v548
        %v553 = vxor.u32 %v545, %v549
        %v554 = vxor.u32 %v546, %v550
        %v555 = vmul.u32 %v551, 2221713035
        %v556 = vmul.u32 %v552, 2221713035
        %v557 = vmul.u32 %v553, 2221713035
        %v558 = vmul.u32 %v554, 2221713035
        %v559 = vshrl.u32 %v555, 16
        %v560 = vshrl.u32 %v556, 16
        %v561 = vshrl.u32 %v557, 16
        %v562 = vshrl.u32 %v558, 16
        %v563 = vxor.u32 %v555, %v559
        %v564 = vxor.u32 %v556, %v560
        %v565 = vxor.u32 %v557, %v561
        %v566 = vxor.u32 %v558, %v562
        %v567 = vshrl.u32 %v563, 8
        %v568 = vshrl.u32 %v564, 8
        %v569 = vshrl.u32 %v565, 8
        %v570 = vshrl.u32 %v566, 8
        %vm571 = vcmp.lt.s32.totalorder %v567, 8388608
        %vm572 = vcmp.lt.s32.totalorder %v568, 8388608
        %vm573 = vcmp.lt.s32.totalorder %v569, 8388608
        %vm574 = vcmp.lt.s32.totalorder %v570, 8388608
        %v575 = vsel %vm571, 2.0, 0.0
        %v576 = vsel %vm572, 2.0, 0.0
        %v577 = vsel %vm573, 2.0, 0.0
        %v578 = vsel %vm574, 2.0, 0.0
        %v579 = vmul.f32 %v527, %v575
        %v580 = vmul.f32 %v528, %v576
        %v581 = vmul.f32 %v529, %v577
        %v582 = vmul.f32 %v530, %v578
        %v583 = vld [vmem:[%s5] sm:$0xff]
        %v584 = vld [vmem:[%s5 + $0x8] sm:$0xff]
        %v585 = vld [vmem:[%s5 + $0x10] sm:$0xff]
        %v586 = vld [vmem:[%s5 + $0x18] sm:$0xff]
        %v587 = vld [vmem:[%s6] sm:$0xff]
        %v588 = vld [vmem:[%s6 + $0x8] sm:$0xff]
        %v589 = vld [vmem:[%s6 + $0x10] sm:$0xff]
        %v590 = vld [vmem:[%s6 + $0x18] sm:$0xff]
        %592 = vset.pattern.permute.xlu0 0
        %593 = vperm.xlu0 %592, %v587
        %v594 = vpop.permute.xlu0 %593
        %597 = vset.pattern.permute.xlu0 0
        %598 = vperm.xlu0 %597, %v588
        %v599 = vpop.permute.xlu0 %598
        %602 = vset.pattern.permute.xlu0 0
        %603 = vperm.xlu0 %602, %v589
        %v604 = vpop.permute.xlu0 %603
        %607 = vset.pattern.permute.xlu0 0
        %608 = vperm.xlu0 %607, %v590
        %v609 = vpop.permute.xlu0 %608
        %v612 = vsel %vm485, %v583, 0
        %v615 = vsel %vm485, %v584, 0
        %v618 = vsel %vm485, %v585, 0
        %v621 = vsel %vm485, %v586, 0
        %623 = vmatpush.msra.mxu0 0.0
        %624 = vmatpush.msra.mxu0 0.0
        %625 = vmatpush.msra.mxu0 0.0
        %626 = vmatpush.msra.mxu0 0.0
        %627 = vmatpush.msra.mxu0 0.0
        %628 = vmatpush.msra.mxu0 0.0
        %629 = vmatpush.msra.mxu0 0.0
        %630 = vmatpush.msra.mxu0 0.0
        %631 = vmatpush.msra.mxu0 0.0
        %632 = vmatpush.msra.mxu0 0.0
        %633 = vmatpush.msra.mxu0 0.0
        %634 = vmatpush.msra.mxu0 0.0
        %635 = vmatpush.msra.mxu0 %v582
        %636 = vmatpush.msra.mxu0 %v581
        %637 = vmatpush.msra.mxu0 %v580
        %638 = vmatpush.msra.mxu0 %v579
        %639 = vmatmul.f32.gmra.mxu0 %v612
        %v640 = vpop.f32.mrf.mxu0
        %v641 = vadd.f32 %v594, %v640
        %642 = vmatmul.f32.gmra.mxu0 %v615
        %v643 = vpop.f32.mrf.mxu0
        %v644 = vadd.f32 %v599, %v643
        %645 = vmatmul.f32.gmra.mxu0 %v618
        %v646 = vpop.f32.mrf.mxu0
        %v647 = vadd.f32 %v604, %v646
        %648 = vmatmul.f32.gmra.mxu0 %v621
        %v649 = vpop.f32.mrf.mxu0
        %v650 = vadd.f32 %v609, %v649
        %651 = vdwg.mxu0
        %v652 = vmax.f32 %v641, 0.0
        %v653 = vmax.f32 %v644, 0.0
        %v654 = vmax.f32 %v647, 0.0
        %v655 = vmax.f32 %v650, 0.0
        %v656 = vadd.s32 %v337, 3668339987
        %v657 = vadd.s32 %v338, 3668339987
        %v658 = vadd.s32 %v339, 3668339987
        %v659 = vadd.s32 %v340, 3668339987
        %v660 = vshrl.u32 %v656, 16
        %v661 = vshrl.u32 %v657, 16
        %v662 = vshrl.u32 %v658, 16
        %v663 = vshrl.u32 %v659, 16
        %v664 = vxor.u32 %v656, %v660
        %v665 = vxor.u32 %v657, %v661
        %v666 = vxor.u32 %v658, %v662
        %v667 = vxor.u32 %v659, %v663
        %v668 = vmul.u32 %v664, 2146121005
        %v669 = vmul.u32 %v665, 2146121005
        %v670 = vmul.u32 %v666, 2146121005
        %v671 = vmul.u32 %v667, 2146121005
        %v672 = vshrl.u32 %v668, 15
        %v673 = vshrl.u32 %v669, 15
        %v674 = vshrl.u32 %v670, 15
        %v675 = vshrl.u32 %v671, 15
        %v676 = vxor.u32 %v668, %v672
        %v677 = vxor.u32 %v669, %v673
        %v678 = vxor.u32 %v670, %v674
        %v679 = vxor.u32 %v671, %v675
        %v680 = vmul.u32 %v676, 2221713035
        %v681 = vmul.u32 %v677, 2221713035
        %v682 = vmul.u32 %v678, 2221713035
        %v683 = vmul.u32 %v679, 2221713035
        %v684 = vshrl.u32 %v680, 16
        %v685 = vshrl.u32 %v681, 16
        %v686 = vshrl.u32 %v682, 16
        %v687 = vshrl.u32 %v683, 16
        %v688 = vxor.u32 %v680, %v684
        %v689 = vxor.u32 %v681, %v685
        %v690 = vxor.u32 %v682, %v686
        %v691 = vxor.u32 %v683, %v687
        %v692 = vshrl.u32 %v688, 8
        %v693 = vshrl.u32 %v689, 8
        %v694 = vshrl.u32 %v690, 8
        %v695 = vshrl.u32 %v691, 8
        %vm696 = vcmp.lt.s32.totalorder %v692, 8388608
        %vm697 = vcmp.lt.s32.totalorder %v693, 8388608
        %vm698 = vcmp.lt.s32.totalorder %v694, 8388608
        %vm699 = vcmp.lt.s32.totalorder %v695, 8388608
        %v700 = vsel %vm696, 2.0, 0.0
        %v701 = vsel %vm697, 2.0, 0.0
        %v702 = vsel %vm698, 2.0, 0.0
        %v703 = vsel %vm699, 2.0, 0.0
        %v704 = vmul.f32 %v652, %v700
        %v705 = vmul.f32 %v653, %v701
        %v706 = vmul.f32 %v654, %v702
        %v707 = vmul.f32 %v655, %v703
        %v708 = vld [vmem:[%s7] sm:$0xff]
        %v709 = vld [vmem:[%s7 + $0x8] sm:$0xff]
        %v710 = vld [vmem:[%s7 + $0x10] sm:$0xff]
        %v711 = vld [vmem:[%s7 + $0x18] sm:$0xff]
        %713 = vset.pattern.permute.xlu0 0
        %714 = vperm.xlu0 %713, %v708
        %v715 = vpop.permute.xlu0 %714
        %718 = vset.pattern.permute.xlu0 0
        %719 = vperm.xlu0 %718, %v709
        %v720 = vpop.permute.xlu0 %719
        %723 = vset.pattern.permute.xlu0 0
        %724 = vperm.xlu0 %723, %v710
        %v725 = vpop.permute.xlu0 %724
        %728 = vset.pattern.permute.xlu0 0
        %729 = vperm.xlu0 %728, %v711
        %v730 = vpop.permute.xlu0 %729
        %v732 = vmul.f32 %v715, %v704
        %v733 = vmul.f32 %v720, %v705
        %v734 = vmul.f32 %v725, %v706
        %v735 = vmul.f32 %v730, %v707
        %v736 = vadd.f32 %v732, %v733
        %v737 = vadd.f32 %v736, %v734
        %v738 = vadd.f32 %v737, %v735
        %v739 = vrot.slane %v738, 4
        %v740 = vadd.f32 %v738, %v739
        %v741 = vrot.slane %v740, 2
        %v742 = vadd.f32 %v740, %v741
        %v743 = vrot.slane %v742, 1
        %v744 = vadd.f32 %v742, %v743
        %v745 = vld [vmem:[#allocation2] sm:$0x1]
        %747 = vset.pattern.permute.xlu0 0
        %748 = vperm.xlu0 %747, %v745
        %v749 = vpop.permute.xlu0 %748
        %v751 = vperm.slane %v749, 0
        %v752 = vadd.f32 %v744, %v751
        %753 = vst [vmem:[%s322] sm:$0x1] %v752
        %s754 = sand.u32 %s227, 1
        %s755 = scalar_lea.sflag [#allocation4], %s754
        %s756 = sand.u32 %s227, 1
        %s757 = scalar_lea.vmem [#allocation3], %s756
        // Predicated region
        $region57: #{tpu_custom_call.1} parent=55 // pred_check
          %p758 = pneg %p237
        $region58: #{tpu_custom_call.1} parent=55 // pred_check_branch
          %760 = sbr.rel (%p758) target = $region60
        $region59: #{tpu_custom_call.1} parent=55 // pred_region
          %762 = vsyncadd %s755, 0
          %s763 = scalar_lea.hbm %s9, %s25
          %s765 = sshll.u32 %s757, 4
          %s766 = int_to_ptr.vmem [resolvable:$true] %s765
          %s767 = sshll.u32 %s763, 4
          %s768 = int_to_ptr.hbm [resolvable:$true] %s767
          %770 = dma.vmem_to_hbm [thread:$0]  %s766, 16, %s768, %s755
        $region60: #{tpu_custom_call.1} parent=55 // pred_fallthru
          _
      $region56: #{tpu_custom_call.1} parent=5 // pred_fallthru
        _
      %p771 = scmp.le.s32.totalorder 2, %s20
      // Predicated region
      $region61: #{tpu_custom_call.1} parent=5 // pred_check
        %p772 = pneg %p771
      $region62: #{tpu_custom_call.1} parent=5 // pred_check_branch
        %774 = sbr.rel (%p772) target = $region64
      $region63: #{tpu_custom_call.1} parent=5 // pred_region
        %s775 = ssub.s32 %s20, 2
        // Predicated region
        $region65: #{tpu_custom_call.1} parent=63 // pred_check
          %p776 = pneg %p243
        $region66: #{tpu_custom_call.1} parent=63 // pred_check_branch
          %778 = sbr.rel (%p776) target = $region68
        $region67: #{tpu_custom_call.1} parent=63 // pred_region
          %s779 = sand.u32 %s228, 1
          %s780 = scalar_lea.sflag [#allocation4], %s779
          %s781 = sand.u32 %s228, 1
          %s782 = scalar_lea.vmem [#allocation3], %s781
          %784 = dma.done %s780, 16
        $region68: #{tpu_custom_call.1} parent=63 // pred_fallthru
          _
      $region64: #{tpu_custom_call.1} parent=5 // pred_fallthru
        _
    $region6: #{tpu_custom_call.1} parent=1 // loop_footer
      %s24 = sadd.s32 1, %s20
    $region7: #{tpu_custom_call.1} parent=1 // loop_footer_branch
      %19 = sbr.rel target = $region3
    $region8: #{tpu_custom_call.1} parent=1 // loop_exit
      _
    %785 = vsyncpa [#allocation4], 1
    %s786 = scalar_lea.sflag [#allocation4], 1
    %787 = vsyncpa %s786, 1

</llo_original>
